<compile_context>
chip_gen: v7x
topology: tpu7x:2x2x1
jax: 0.10.0
libtpu: 0.0.40
codegen_flags: <defaults>
</compile_context>

<pallas_src>
from functools import partial

import jax
import jax.numpy as jnp
from jax.experimental import pallas as pl
from jax.experimental.pallas import tpu as pltpu

LANES = 128


def gam_kernel(x_ref, w_ref, sel_ref, bias_ref, o_ref):
    """One tile of rows.

    x_ref   : (TR, 128) f32  flat (batch, judge) values; lane l -> judge l % J of sample l // J
    w_ref   : (2, 128)  f32  row 0 = v_pos lane pattern, row 1 = -v_neg lane pattern (resident)
    sel_ref : (128, 128//J) f32  0/1 group-reduction matrix: sel[l, l//J] = 1 (resident)
    bias_ref: (1,) f32 scalar in SMEM
    o_ref   : (TR, 128//J) f32  one prediction per sample in this tile
    """
    x = x_ref[...]                                           # (TR, 128)
    # Exact collapse of Linear(1,H) -> ReLU -> Linear(H,1):  f(s) = s*v_pos if s>0 else s*(-v_neg)
    w = jnp.where(x > 0, w_ref[0:1, :], w_ref[1:2, :])       # sublane-broadcast (1,128) rows
    contrib = x * w                                          # (TR, 128) per-(sample,judge) term
    # Sum each group of J adjacent lanes (the judges of one sample) and lane-compact in a
    # single op on the otherwise-idle MXU; add the global bias.
    o_ref[...] = (
        jnp.dot(contrib, sel_ref[...], preferred_element_type=jnp.float32) + bias_ref[0]
    )


@partial(jax.jit, static_argnames=("block_rows",))
def gam_forward(x, w1, w2, bias, *, block_rows=16384):
    """x: (B, J) f32, w1/w2: (J, H) f32, bias: (1,) f32  ->  (B, 1) f32."""
    B, J = x.shape
    assert LANES % J == 0, "lane-interleaved layout requires n_judges to divide 128"
    # TODO(synk): hidden == 0 (pure Linear(1,1) per judge) variant not implemented here.
    G = LANES // J  # samples per 128-lane row

    # Collapse the hidden dimension (exact; valid for any sign of W1/W2).
    v_pos = jnp.sum(jnp.maximum(w1, 0.0) * w2, axis=1)       # (J,)
    v_neg = jnp.sum(jnp.maximum(-w1, 0.0) * w2, axis=1)      # (J,)
    # Lane-pattern weights (lane l holds judge l % J); single resident (2, 128) buffer.
    w_rows = jnp.stack([jnp.tile(v_pos, G), jnp.tile(-v_neg, G)], axis=0)

    # 0/1 reduction matrix: lane l -> sample group l // J.
    sel = (jnp.arange(LANES)[:, None] // J == jnp.arange(G)[None, :]).astype(jnp.float32)

    # Consume x in native (B, J) row-major layout via a free flat reshape -> read HBM once.
    # Only pad the flat tail when B*J is not a multiple of 128 (no full pad/transpose pass).
    n = B * J
    xf = x.reshape(n)
    n_pad = (-n) % LANES
    if n_pad:
        xf = jnp.pad(xf, (0, n_pad))
    rows = (n + n_pad) // LANES
    xr = xf.reshape(rows, LANES)                             # (rows, 128)

    # VMEM-limited row tile; keep it a multiple of 8 sublanes when it doesn't cover all rows.
    tr = min(block_rows, rows)
    if tr < rows:
        tr = max(8, (tr // 8) * 8)
    grid = (pl.cdiv(rows, tr),)

    out = pl.pallas_call(
        gam_kernel,
        out_shape=jax.ShapeDtypeStruct((rows, G), jnp.float32),
        grid=grid,
        in_specs=[
            pl.BlockSpec((tr, LANES), lambda i: (i, 0)),                   # x row tile
            pl.BlockSpec((2, LANES), lambda i: (0, 0)),                    # weights (resident)
            pl.BlockSpec((LANES, G), lambda i: (0, 0)),                    # selection (resident)
            pl.BlockSpec(memory_space=pltpu.MemorySpace.SMEM),             # bias scalar
        ],
        out_specs=pl.BlockSpec((tr, G), lambda i: (i, 0)),
        compiler_params=pltpu.CompilerParams(
            dimension_semantics=("parallel",),      # batch tiles shard across TCs (v7x)
            vmem_limit_bytes=48 * 1024 * 1024,      # > v5e 16 MiB default, < v7x 64 MiB physical
        ),
    )(xr, w_rows, sel, bias)

    # out[r, g] is the prediction for sample r*G + g; flat order == batch order.
    return out.reshape(-1)[:B].reshape(B, 1)


def make_params(key, n_judges, hidden, monotone=True, initial_bias=None):
    """Deterministic init mirroring OneDimNet (__init__ + monotone clamp)."""
    k1, k2 = jax.random.split(key)
    # nn.init.normal_(p, mean=0.0, std=0.05)
    w1 = 0.05 * jax.random.normal(k1, (n_judges, hidden), jnp.float32)
    w2 = 0.05 * jax.random.normal(k2, (n_judges, hidden), jnp.float32)
    if monotone and hidden > 0:
        # p.data.clamp_(min=0) performed in OneDimNet.forward before the net.
        w1 = jnp.maximum(w1, 0.0)
        w2 = jnp.maximum(w2, 0.0)
    b = jnp.array([0.0 if initial_bias is None else float(initial_bias)], jnp.float32)
    return w1, w2, b


def gam_reference(x, w1, w2, bias):
    """Pure-JAX reference of the PyTorch forward (full hidden dim), for checking."""
    h = jnp.maximum(x[:, :, None] * w1[None, :, :], 0.0)       # (B, J, H)
    contribs = jnp.sum(h * w2[None, :, :], axis=2)             # (B, J)
    return jnp.sum(contribs, axis=1, keepdims=True) + bias[0]  # (B, 1)


if __name__ == "__main__":
    N_JUDGES, HIDDEN = 4, 16
    key = jax.random.PRNGKey(0)
    kx1, kp1, kx2, kp2 = jax.random.split(key, 4)

    # Case 1: tiny batch (exercises flat-tail padding), monotone weights, non-zero bias.
    B1 = 8
    x1 = jax.random.normal(kx1, (B1, N_JUDGES), jnp.float32)
    w1a, w2a, ba = make_params(kp1, N_JUDGES, HIDDEN, monotone=True, initial_bias=0.25)
    out1 = jax.block_until_ready(gam_forward(x1, w1a, w2a, ba))
    ref1 = gam_reference(x1, w1a, w2a, ba)
    assert out1.shape == (B1, 1), out1.shape
    assert jnp.allclose(out1, ref1, atol=1e-5, rtol=1e-5), (out1, ref1)

    # Case 2: ragged batch + multi-tile grid (small block_rows forces a ragged last block)
    # and non-monotone weights (exercises the exact two-sided v_pos / v_neg split).
    B2 = 300
    x2 = jax.random.normal(kx2, (B2, N_JUDGES), jnp.float32)
    w1b, w2b, bb = make_params(kp2, N_JUDGES, HIDDEN, monotone=False)
    out2 = jax.block_until_ready(gam_forward(x2, w1b, w2b, bb, block_rows=8))
    ref2 = gam_reference(x2, w1b, w2b, bb)
    assert out2.shape == (B2, 1), out2.shape
    assert jnp.allclose(out2, ref2, atol=1e-5, rtol=1e-5), (out2, ref2)

    # Case 3: lane-aligned batch (no-pad fast path), default large tile.
    B3 = 64
    x3 = jax.random.normal(kx1, (B3, N_JUDGES), jnp.float32)
    out3 = jax.block_until_ready(gam_forward(x3, w1a, w2a, ba))
    ref3 = gam_reference(x3, w1a, w2a, ba)
    assert out3.shape == (B3, 1), out3.shape
    assert jnp.allclose(out3, ref3, atol=1e-5, rtol=1e-5), (out3, ref3)

    print("KERNEL_OK")
</pallas_src>

<mosaic_0001>
module attributes {stable_mosaic.version = 11 : i64} {
  func.func @gam_kernel(%arg0: i32, %arg1: memref<1x128xf32, #tpu.memory_space<vmem>>, %arg2: memref<2x128xf32, #tpu.memory_space<vmem>>, %arg3: memref<128x32xf32, #tpu.memory_space<vmem>>, %arg4: memref<1xf32, #tpu.memory_space<smem>>, %arg5: memref<1x32xf32, #tpu.memory_space<vmem>>) attributes {dimension_semantics = [#tpu.dimension_semantics<parallel>], iteration_bounds = array<i64: 1>, scalar_prefetch = 0 : i64, scratch_operands = 0 : i64, tpu.core_type = #tpu.core_type<tc>, window_params = [{transform_indices = @transform_0, window_bounds = array<i64: 1, 128>}, {pipeline_mode = #tpu.pipeline_mode<synchronous>, transform_indices = @transform_1, window_bounds = array<i64: 2, 128>}, {pipeline_mode = #tpu.pipeline_mode<synchronous>, transform_indices = @transform_2, window_bounds = array<i64: 128, 32>}, {transform_indices = @transform_3, window_bounds = array<i64: 1>}, {transform_indices = @transform_4, window_bounds = array<i64: 1, 32>}]} {
    %c0 = arith.constant 0 : index
    %c0_0 = arith.constant 0 : index
    %0 = vector.load %arg1[%c0, %c0_0] : memref<1x128xf32, #tpu.memory_space<vmem>>, vector<1x128xf32>
    %cst = arith.constant 0.000000e+00 : f32
    %1 = vector.broadcast %cst : f32 to vector<1x128xf32>
    %2 = arith.cmpf ogt, %0, %1 : vector<1x128xf32>
    %c0_1 = arith.constant 0 : index
    %c0_2 = arith.constant 0 : index
    %3 = vector.load %arg2[%c0_1, %c0_2] : memref<2x128xf32, #tpu.memory_space<vmem>>, vector<1x128xf32>
    %c1 = arith.constant 1 : index
    %c0_3 = arith.constant 0 : index
    %4 = vector.load %arg2[%c1, %c0_3] : memref<2x128xf32, #tpu.memory_space<vmem>>, vector<1x128xf32>
    %5 = arith.select %2, %3, %4 : vector<1x128xi1>, vector<1x128xf32>
    %6 = arith.mulf %0, %5 : vector<1x128xf32>
    %c0_4 = arith.constant 0 : index
    %c0_5 = arith.constant 0 : index
    %7 = vector.load %arg3[%c0_4, %c0_5] : memref<128x32xf32, #tpu.memory_space<vmem>>, vector<128x32xf32>
    %cst_6 = arith.constant dense<0.000000e+00> : vector<1x32xf32>
    %8 = tpu.matmul %6, %7, %cst_6 {dimension_numbers = #tpu.dot_dimension_numbers<[1], [0], [0], [1], [0, 0, 1, 1], [], []>} : vector<1x128xf32>, vector<128x32xf32>, vector<1x32xf32> -> vector<1x32xf32>
    %c0_7 = arith.constant 0 : index
    %9 = memref.load %arg4[%c0_7] : memref<1xf32, #tpu.memory_space<smem>>
    %10 = vector.broadcast %9 : f32 to vector<1x32xf32>
    %11 = arith.addf %8, %10 : vector<1x32xf32>
    %c0_8 = arith.constant 0 : index
    %c0_9 = arith.constant 0 : index
    %12 = vector.load %arg5[%c0_8, %c0_9] : memref<1x32xf32, #tpu.memory_space<vmem>>, vector<1x32xf32>
    tpu.vector_store %arg5[%c0_8, %c0_9], %11 {strides = array<i32>} : memref<1x32xf32, #tpu.memory_space<vmem>>, vector<1x32xf32>,
    return
  }
  func.func @transform_0(%arg0: i32) -> (i32, i32) {
    %c0_i32 = arith.constant 0 : i32
    %c0_i32_0 = arith.constant 0 : i32
    return %arg0, %c0_i32 : i32, i32
  }
  func.func @transform_1(%arg0: i32) -> (i32, i32) {
    %c0_i32 = arith.constant 0 : i32
    %c0_i32_0 = arith.constant 0 : i32
    %c0_i32_1 = arith.constant 0 : i32
    return %c0_i32, %c0_i32_0 : i32, i32
  }
  func.func @transform_2(%arg0: i32) -> (i32, i32) {
    %c0_i32 = arith.constant 0 : i32
    %c0_i32_0 = arith.constant 0 : i32
    %c0_i32_1 = arith.constant 0 : i32
    return %c0_i32, %c0_i32_0 : i32, i32
  }
  func.func @transform_3(%arg0: i32) -> i32 {
    %c0_i32 = arith.constant 0 : i32
    %c0_i32_0 = arith.constant 0 : i32
    return %c0_i32 : i32
  }
  func.func @transform_4(%arg0: i32) -> (i32, i32) {
    %c0_i32 = arith.constant 0 : i32
    %c0_i32_0 = arith.constant 0 : i32
    return %arg0, %c0_i32 : i32, i32
  }
}

</mosaic_0001>

<llo_original>
// kernel: neg.5
$region0: #{neg.5}
  #allocation0 [shape = 's32[1]{0}', space=sflag, size = 0x4, scoped, tag = 'scoped memory for neg.5']
  %s0 = inlined_call_operand.vmem [shape: f32[4], index: 0, kind: input, shape index: {}]
  %s1 = inlined_call_operand.vmem [shape: f32[4], index: 1, kind: output, shape index: {}]
  %v2 = vld [vmem:[%s0] sm:$0x1]
  %3 = xla_tuple %v2
  %4 = xla_tuple %3
  %v5 = vxor.u32 %v2, 2147483648
  %6 = xla_tuple %v5
  %7 = vst [vmem:[%s1] sm:$0x1] %v5

// kernel: tile.17
$region0: #{tile.17}
  #allocation0 [shape = 's32[1]{0}', space=sflag, size = 0x4, scoped, tag = 'scoped memory for tile.17']
  %s0 = inlined_call_operand.vmem [shape: f32[4], index: 0, kind: input, shape index: {}]
  %s1 = inlined_call_operand.vmem [shape: f32[32,4], index: 1, kind: output, shape index: {}]
  // Predicated region
  $region2: #{tile.17} parent=0 // pred_check
    _
  $region3: #{tile.17} parent=0 // pred_check_branch
    %3 = sbr.rel (0) target = $region5
  $region4: #{tile.17} parent=0 // pred_region
    _
  $region5: #{tile.17} parent=0 // pred_fallthru
    _
  %v4 = vld [vmem:[%s0] ss:$0 sm:$0xff]
  %5 = vst [vmem:[%s1] sm:$0xff] %v4
  %s6 = scalar_lea.vmem %s1, 8
  %7 = vst [vmem:[%s6] sm:$0xff] %v4
  %s8 = scalar_lea.vmem %s1, 16
  %9 = vst [vmem:[%s8] sm:$0xff] %v4
  %s10 = scalar_lea.vmem %s1, 24
  %11 = vst [vmem:[%s10] sm:$0xff] %v4

// kernel: tile.19
$region0: #{tile.19}
  %s0 = inlined_call_operand.vmem [shape: f32[32,4], index: 0, kind: input, shape index: {}]
  %s1 = inlined_call_operand.vmem [shape: f32[1,128], index: 1, kind: output, shape index: {}]
  $region1: #{tile.19} parent=0
    #allocation0 [shape = 'u8[4096]{0}', space=vmem, size = 0x1000, scoped, tag = 'scoped mem for output reshape']
    %v2 = vld [vmem:[%s0] sm:$0x1]
    %vm3 = vcmask 31744
    %4 = vst.msk [vmem:[#allocation0] sm:$0x1] %vm3, %v2
    %s5 = scalar_lea.vmem %s0, 31
    %v6 = vld [vmem:[%s5] sm:$0x1]
    %7 = vrot.lane.b32.xlu0 %v6, 124
    %v8 = vpop.permute.xlu0 %7
    %vm9 = vcmask 1048544
    %10 = vst.msk [vmem:[#allocation0] sm:$0x1] %vm9, %v8
    %s11 = scalar_lea.vmem %s0, 30
    %v12 = vld [vmem:[%s11] sm:$0x1]
    %13 = vrot.lane.b32.xlu0 %v12, 120
    %v14 = vpop.permute.xlu0 %13
    %vm15 = vcmask 1015744
    %16 = vst.msk [vmem:[#allocation0] sm:$0x1] %vm15, %v14
    %s17 = scalar_lea.vmem %s0, 29
    %v18 = vld [vmem:[%s17] sm:$0x1]
    %19 = vrot.lane.b32.xlu0 %v18, 116
    %v20 = vpop.permute.xlu0 %19
    %vm21 = vcmask 982944
    %22 = vst.msk [vmem:[#allocation0] sm:$0x1] %vm21, %v20
    %s23 = scalar_lea.vmem %s0, 28
    %v24 = vld [vmem:[%s23] sm:$0x1]
    %25 = vrot.lane.b32.xlu0 %v24, 112
    %v26 = vpop.permute.xlu0 %25
    %vm27 = vcmask 950144
    %28 = vst.msk [vmem:[#allocation0] sm:$0x1] %vm27, %v26
    %s29 = scalar_lea.vmem %s0, 27
    %v30 = vld [vmem:[%s29] sm:$0x1]
    %31 = vrot.lane.b32.xlu0 %v30, 108
    %v32 = vpop.permute.xlu0 %31
    %vm33 = vcmask 917344
    %34 = vst.msk [vmem:[#allocation0] sm:$0x1] %vm33, %v32
    %s35 = scalar_lea.vmem %s0, 26
    %v36 = vld [vmem:[%s35] sm:$0x1]
    %37 = vrot.lane.b32.xlu0 %v36, 104
    %v38 = vpop.permute.xlu0 %37
    %vm39 = vcmask 884544
    %40 = vst.msk [vmem:[#allocation0] sm:$0x1] %vm39, %v38
    %s41 = scalar_lea.vmem %s0, 25
    %v42 = vld [vmem:[%s41] sm:$0x1]
    %43 = vrot.lane.b32.xlu0 %v42, 100
    %v44 = vpop.permute.xlu0 %43
    %vm45 = vcmask 851744
    %46 = vst.msk [vmem:[#allocation0] sm:$0x1] %vm45, %v44
    %s47 = scalar_lea.vmem %s0, 24
    %v48 = vld [vmem:[%s47] sm:$0x1]
    %49 = vrot.lane.b32.xlu0 %v48, 96
    %v50 = vpop.permute.xlu0 %49
    %vm51 = vcmask 818944
    %52 = vst.msk [vmem:[#allocation0] sm:$0x1] %vm51, %v50
    %s53 = scalar_lea.vmem %s0, 23
    %v54 = vld [vmem:[%s53] sm:$0x1]
    %55 = vrot.lane.b32.xlu0 %v54, 92
    %v56 = vpop.permute.xlu0 %55
    %vm57 = vcmask 786144
    %58 = vst.msk [vmem:[#allocation0] sm:$0x1] %vm57, %v56
    %s59 = scalar_lea.vmem %s0, 22
    %v60 = vld [vmem:[%s59] sm:$0x1]
    %61 = vrot.lane.b32.xlu0 %v60, 88
    %v62 = vpop.permute.xlu0 %61
    %vm63 = vcmask 753344
    %64 = vst.msk [vmem:[#allocation0] sm:$0x1] %vm63, %v62
    %s65 = scalar_lea.vmem %s0, 21
    %v66 = vld [vmem:[%s65] sm:$0x1]
    %67 = vrot.lane.b32.xlu0 %v66, 84
    %v68 = vpop.permute.xlu0 %67
    %vm69 = vcmask 720544
    %70 = vst.msk [vmem:[#allocation0] sm:$0x1] %vm69, %v68
    %s71 = scalar_lea.vmem %s0, 20
    %v72 = vld [vmem:[%s71] sm:$0x1]
    %73 = vrot.lane.b32.xlu0 %v72, 80
    %v74 = vpop.permute.xlu0 %73
    %vm75 = vcmask 687744
    %76 = vst.msk [vmem:[#allocation0] sm:$0x1] %vm75, %v74
    %s77 = scalar_lea.vmem %s0, 19
    %v78 = vld [vmem:[%s77] sm:$0x1]
    %79 = vrot.lane.b32.xlu0 %v78, 76
    %v80 = vpop.permute.xlu0 %79
    %vm81 = vcmask 654944
    %82 = vst.msk [vmem:[#allocation0] sm:$0x1] %vm81, %v80
    %s83 = scalar_lea.vmem %s0, 18
    %v84 = vld [vmem:[%s83] sm:$0x1]
    %85 = vrot.lane.b32.xlu0 %v84, 72
    %v86 = vpop.permute.xlu0 %85
    %vm87 = vcmask 622144
    %88 = vst.msk [vmem:[#allocation0] sm:$0x1] %vm87, %v86
    %s89 = scalar_lea.vmem %s0, 17
    %v90 = vld [vmem:[%s89] sm:$0x1]
    %91 = vrot.lane.b32.xlu0 %v90, 68
    %v92 = vpop.permute.xlu0 %91
    %vm93 = vcmask 589344
    %94 = vst.msk [vmem:[#allocation0] sm:$0x1] %vm93, %v92
    %s95 = scalar_lea.vmem %s0, 16
    %v96 = vld [vmem:[%s95] sm:$0x1]
    %97 = vrot.lane.b32.xlu0 %v96, 64
    %v98 = vpop.permute.xlu0 %97
    %vm99 = vcmask 556544
    %100 = vst.msk [vmem:[#allocation0] sm:$0x1] %vm99, %v98
    %s101 = scalar_lea.vmem %s0, 15
    %v102 = vld [vmem:[%s101] sm:$0x1]
    %103 = vrot.lane.b32.xlu0 %v102, 60
    %v104 = vpop.permute.xlu0 %103
    %vm105 = vcmask 523744
    %106 = vst.msk [vmem:[#allocation0] sm:$0x1] %vm105, %v104
    %s107 = scalar_lea.vmem %s0, 14
    %v108 = vld [vmem:[%s107] sm:$0x1]
    %109 = vrot.lane.b32.xlu0 %v108, 56
    %v110 = vpop.permute.xlu0 %109
    %vm111 = vcmask 490944
    %112 = vst.msk [vmem:[#allocation0] sm:$0x1] %vm111, %v110
    %s113 = scalar_lea.vmem %s0, 13
    %v114 = vld [vmem:[%s113] sm:$0x1]
    %115 = vrot.lane.b32.xlu0 %v114, 52
    %v116 = vpop.permute.xlu0 %115
    %vm117 = vcmask 458144
    %118 = vst.msk [vmem:[#allocation0] sm:$0x1] %vm117, %v116
    %s119 = scalar_lea.vmem %s0, 12
    %v120 = vld [vmem:[%s119] sm:$0x1]
    %121 = vrot.lane.b32.xlu0 %v120, 48
    %v122 = vpop.permute.xlu0 %121
    %vm123 = vcmask 425344
    %124 = vst.msk [vmem:[#allocation0] sm:$0x1] %vm123, %v122
    %s125 = scalar_lea.vmem %s0, 11
    %v126 = vld [vmem:[%s125] sm:$0x1]
    %127 = vrot.lane.b32.xlu0 %v126, 44
    %v128 = vpop.permute.xlu0 %127
    %vm129 = vcmask 392544
    %130 = vst.msk [vmem:[#allocation0] sm:$0x1] %vm129, %v128
    %s131 = scalar_lea.vmem %s0, 10
    %v132 = vld [vmem:[%s131] sm:$0x1]
    %133 = vrot.lane.b32.xlu0 %v132, 40
    %v134 = vpop.permute.xlu0 %133
    %vm135 = vcmask 359744
    %136 = vst.msk [vmem:[#allocation0] sm:$0x1] %vm135, %v134
    %s137 = scalar_lea.vmem %s0, 9
    %v138 = vld [vmem:[%s137] sm:$0x1]
    %139 = vrot.lane.b32.xlu0 %v138, 36
    %v140 = vpop.permute.xlu0 %139
    %vm141 = vcmask 326944
    %142 = vst.msk [vmem:[#allocation0] sm:$0x1] %vm141, %v140
    %s143 = scalar_lea.vmem %s0, 8
    %v144 = vld [vmem:[%s143] sm:$0x1]
    %145 = vrot.lane.b32.xlu0 %v144, 32
    %v146 = vpop.permute.xlu0 %145
    %vm147 = vcmask 294144
    %148 = vst.msk [vmem:[#allocation0] sm:$0x1] %vm147, %v146
    %s149 = scalar_lea.vmem %s0, 7
    %v150 = vld [vmem:[%s149] sm:$0x1]
    %151 = vrot.lane.b32.xlu0 %v150, 28
    %v152 = vpop.permute.xlu0 %151
    %vm153 = vcmask 261344
    %154 = vst.msk [vmem:[#allocation0] sm:$0x1] %vm153, %v152
    %s155 = scalar_lea.vmem %s0, 6
    %v156 = vld [vmem:[%s155] sm:$0x1]
    %157 = vrot.lane.b32.xlu0 %v156, 24
    %v158 = vpop.permute.xlu0 %157
    %vm159 = vcmask 228544
    %160 = vst.msk [vmem:[#allocation0] sm:$0x1] %vm159, %v158
    %s161 = scalar_lea.vmem %s0, 5
    %v162 = vld [vmem:[%s161] sm:$0x1]
    %163 = vrot.lane.b32.xlu0 %v162, 20
    %v164 = vpop.permute.xlu0 %163
    %vm165 = vcmask 195744
    %166 = vst.msk [vmem:[#allocation0] sm:$0x1] %vm165, %v164
    %s167 = scalar_lea.vmem %s0, 4
    %v168 = vld [vmem:[%s167] sm:$0x1]
    %169 = vrot.lane.b32.xlu0 %v168, 16
    %v170 = vpop.permute.xlu0 %169
    %vm171 = vcmask 162944
    %172 = vst.msk [vmem:[#allocation0] sm:$0x1] %vm171, %v170
    %s173 = scalar_lea.vmem %s0, 3
    %v174 = vld [vmem:[%s173] sm:$0x1]
    %175 = vrot.lane.b32.xlu0 %v174, 12
    %v176 = vpop.permute.xlu0 %175
    %vm177 = vcmask 130144
    %178 = vst.msk [vmem:[#allocation0] sm:$0x1] %vm177, %v176
    %s179 = scalar_lea.vmem %s0, 2
    %v180 = vld [vmem:[%s179] sm:$0x1]
    %181 = vrot.lane.b32.xlu0 %v180, 8
    %v182 = vpop.permute.xlu0 %181
    %vm183 = vcmask 97344
    %184 = vst.msk [vmem:[#allocation0] sm:$0x1] %vm183, %v182
    %s185 = scalar_lea.vmem %s0, 1
    %v186 = vld [vmem:[%s185] sm:$0x1]
    %187 = vrot.lane.b32.xlu0 %v186, 4
    %v188 = vpop.permute.xlu0 %187
    %vm189 = vcmask 64544
    %190 = vst.msk [vmem:[#allocation0] sm:$0x1] %vm189, %v188
    %s192 = sshllo.u32 0, 1
    %v194 = vld [vmem:[#allocation0] sm:%s192]
    %s195 = sshllo.u32 0, 1
    %196 = vst [vmem:[%s1] sm:%s195] %v194

// kernel: gam_forward.1
$region0: #{gam_forward.1}
  #allocation0 [shape = 'u32[]', space=smem, size = 0x4, offset = 0x4, fixed_abs, tag = 'smem constant byte address 0x4 - core index']
  #allocation1 [shape = 'u32[144,128]{1,0:T(1,128)}', space=vmem, size = 0x12000, scoped, tag = 'internal scratch']
  #allocation2 [shape = 'f32[1]{0:T(128)S(6)}', space=smem, size = 0x200, scoped, tag = 'scoped memory for gam_forward.1']
  %s0 = inlined_call_operand.vmem [shape: f32[1,128], index: 0, kind: input, shape index: {}]
  %s1 = inlined_call_operand.vmem [shape: f32[2,128], index: 1, kind: input, shape index: {}]
  %s2 = inlined_call_operand.vmem [shape: f32[128,32], index: 2, kind: input, shape index: {}]
  %s3 = inlined_call_operand.<no memory space> [shape: f32[1], index: 3, kind: input, shape index: {}]
  %s4 = inlined_call_operand.vmem [shape: f32[1,32], index: 4, kind: output, shape index: {}]
  %s5 = sld [smem:[#allocation0]]
  $region26: #{gam_forward.1} parent=0
    _
  %s7 = ssub.s32 1, %s5
  %s8 = scalar_select 0, %s7, %s5
  %9 = sst [smem:[#allocation2]] %s3
  // Predicated region
  $region2: #{gam_forward.1} parent=0 // pred_check
    _
  $region3: #{gam_forward.1} parent=0 // pred_check_branch
    %11 = sbr.rel (0) target = $region5
  $region4: #{gam_forward.1} parent=0 // pred_region
    _
  $region5: #{gam_forward.1} parent=0 // pred_fallthru
    _
  // Predicated region
  $region6: #{gam_forward.1} parent=0 // pred_check
    _
  $region7: #{gam_forward.1} parent=0 // pred_check_branch
    %13 = sbr.rel (0) target = $region9
  $region8: #{gam_forward.1} parent=0 // pred_region
    _
  $region9: #{gam_forward.1} parent=0 // pred_fallthru
    _
  // Predicated region
  $region10: #{gam_forward.1} parent=0 // pred_check
    _
  $region11: #{gam_forward.1} parent=0 // pred_check_branch
    %15 = sbr.rel (0) target = $region13
  $region12: #{gam_forward.1} parent=0 // pred_region
    _
  $region13: #{gam_forward.1} parent=0 // pred_fallthru
    _
  // Predicated region
  $region14: #{gam_forward.1} parent=0 // pred_check
    _
  $region15: #{gam_forward.1} parent=0 // pred_check_branch
    %17 = sbr.rel (0) target = $region17
  $region16: #{gam_forward.1} parent=0 // pred_region
    _
  $region17: #{gam_forward.1} parent=0 // pred_fallthru
    _
  %v18 = vld [vmem:[%s0] sm:$0x1]
  %vm19 = vcmp.gt.f32.partialorder %v18, 0.0
  %v20 = vld [vmem:[%s1] sm:$0x1]
  %v21 = vld [vmem:[%s1 + $0x1] sm:$0x1]
  %v22 = vsel %vm19, %v20, %v21
  %v23 = vmul.f32 %v18, %v22
  %v24 = vld [vmem:[%s2] sm:$0xff]
  %v25 = vld [vmem:[%s2 + $0x8] sm:$0xff]
  %v26 = vld [vmem:[%s2 + $0x10] sm:$0xff]
  %v27 = vld [vmem:[%s2 + $0x18] sm:$0xff]
  %v28 = vld [vmem:[%s2 + $0x20] sm:$0xff]
  %v29 = vld [vmem:[%s2 + $0x28] sm:$0xff]
  %v30 = vld [vmem:[%s2 + $0x30] sm:$0xff]
  %v31 = vld [vmem:[%s2 + $0x38] sm:$0xff]
  %v32 = vld [vmem:[%s2 + $0x40] sm:$0xff]
  %v33 = vld [vmem:[%s2 + $0x48] sm:$0xff]
  %v34 = vld [vmem:[%s2 + $0x50] sm:$0xff]
  %v35 = vld [vmem:[%s2 + $0x58] sm:$0xff]
  %v36 = vld [vmem:[%s2 + $0x60] sm:$0xff]
  %v37 = vld [vmem:[%s2 + $0x68] sm:$0xff]
  %v38 = vld [vmem:[%s2 + $0x70] sm:$0xff]
  %v39 = vld [vmem:[%s2 + $0x78] sm:$0xff]
  %s40 = sld [smem:[#allocation2]]
  %v41 = vstv %s40
  %42 = vmatprep.subr.mxu0 0.0
  %43 = vmatpush1.msra.mxu0 %v24
  %44 = vmatprep.subr.mxu0 0.0
  %45 = vmatpush1.msra.mxu0 %v25
  %46 = vmatprep.subr.mxu0 0.0
  %47 = vmatpush1.msra.mxu0 %v26
  %48 = vmatprep.subr.mxu0 0.0
  %49 = vmatpush1.msra.mxu0 %v27
  %50 = vmatprep.subr.mxu0 0.0
  %51 = vmatpush1.msra.mxu0 %v28
  %52 = vmatprep.subr.mxu0 0.0
  %53 = vmatpush1.msra.mxu0 %v29
  %54 = vmatprep.subr.mxu0 0.0
  %55 = vmatpush1.msra.mxu0 %v30
  %56 = vmatprep.subr.mxu0 0.0
  %57 = vmatpush1.msra.mxu0 %v31
  %58 = vmatprep.subr.mxu0 0.0
  %59 = vmatpush1.msra.mxu0 %v32
  %60 = vmatprep.subr.mxu0 0.0
  %61 = vmatpush1.msra.mxu0 %v33
  %62 = vmatprep.subr.mxu0 0.0
  %63 = vmatpush1.msra.mxu0 %v34
  %64 = vmatprep.subr.mxu0 0.0
  %65 = vmatpush1.msra.mxu0 %v35
  %66 = vmatprep.subr.mxu0 0.0
  %67 = vmatpush1.msra.mxu0 %v36
  %68 = vmatprep.subr.mxu0 0.0
  %69 = vmatpush1.msra.mxu0 %v37
  %70 = vmatprep.subr.mxu0 0.0
  %71 = vmatpush1.msra.mxu0 %v38
  %72 = vmatprep.subr.mxu0 0.0
  %73 = vmatpush1.msra.mxu0 %v39
  %74 = vmatprep.subr.mxu0 0.0
  %75 = vmatpush1.msra.mxu0 0.0
  %76 = vmatprep.subr.mxu0 0.0
  %77 = vmatpush1.msra.mxu0 0.0
  %78 = vmatprep.subr.mxu0 0.0
  %79 = vmatpush1.msra.mxu0 0.0
  %80 = vmatprep.subr.mxu0 0.0
  %81 = vmatpush1.msra.mxu0 0.0
  %82 = vmatprep.subr.mxu0 0.0
  %83 = vmatpush1.msra.mxu0 0.0
  %84 = vmatprep.subr.mxu0 0.0
  %85 = vmatpush1.msra.mxu0 0.0
  %86 = vmatprep.subr.mxu0 0.0
  %87 = vmatpush1.msra.mxu0 0.0
  %88 = vmatprep.subr.mxu0 0.0
  %89 = vmatpush1.msra.mxu0 0.0
  %90 = vmatprep.subr.mxu0 0.0
  %91 = vmatpush1.msra.mxu0 0.0
  %92 = vmatprep.subr.mxu0 0.0
  %93 = vmatpush1.msra.mxu0 0.0
  %94 = vmatprep.subr.mxu0 0.0
  %95 = vmatpush1.msra.mxu0 0.0
  %96 = vmatprep.subr.mxu0 0.0
  %97 = vmatpush1.msra.mxu0 0.0
  %98 = vmatprep.subr.mxu0 0.0
  %99 = vmatpush1.msra.mxu0 0.0
  %100 = vmatprep.subr.mxu0 0.0
  %101 = vmatpush1.msra.mxu0 0.0
  %102 = vmatprep.subr.mxu0 0.0
  %103 = vmatpush1.msra.mxu0 0.0
  %104 = vmatprep.subr.mxu0 0.0
  %105 = vmatpush1.msra.mxu0 0.0
  %106 = vmatprep.mubr.f32.mxu0 0.0
  %107 = vmatmul.mubr.f32.gmra.mrb[0].mxu0 %v23
  %v108 = vpop.f32.mrb[0].mxu0
  %v109 = vadd.f32 %v41, %v108
  %v110 = vpop.f32.mrb[0].mxu0
  %111 = vdwg.mxu0
  %vm112 = vcmask 253952
  %113 = vst.msk [vmem:[%s4] sm:$0x1] %vm112, %v109
  // Predicated region
  $region18: #{gam_forward.1} parent=0 // pred_check
    _
  $region19: #{gam_forward.1} parent=0 // pred_check_branch
    %115 = sbr.rel (0) target = $region21
  $region20: #{gam_forward.1} parent=0 // pred_region
    _
  $region21: #{gam_forward.1} parent=0 // pred_fallthru
    _
  // Predicated region
  $region22: #{gam_forward.1} parent=0 // pred_check
    _
  $region23: #{gam_forward.1} parent=0 // pred_check_branch
    %117 = sbr.rel (0) target = $region25
  $region24: #{gam_forward.1} parent=0 // pred_region
    _
  $region25: #{gam_forward.1} parent=0 // pred_fallthru
    _

</llo_original>
